<compile_context>
chip_gen: v5e
topology: v5e:2x2
jax: 0.10.0
libtpu: 0.0.40
codegen_flags: <defaults>
</compile_context>

<pallas_src>
import functools

import numpy as np
import jax
import jax.numpy as jnp
from jax import lax
from jax.experimental import pallas as pl
from jax.experimental.pallas import tpu as pltpu


def _round_up(v, m):
    return (v + m - 1) // m * m


# ----------------------------- Pallas kernel --------------------------------

def _llsa_kernel(oh_st_ref, oh_ts_ref, inv_cnt_ref, x_ref, w_ref, b_ref,
                 out_ref, stats_ref, *, eps, denorm, num_segments):
    x = x_ref[...].astype(jnp.float32)            # (T, TC)
    onehot_st = oh_st_ref[...]                    # (S, T)  resident, exact {0,1} f32
    onehot_ts = oh_ts_ref[...]                    # (T, S)  resident
    inv_cnt = inv_cnt_ref[...]                    # (S, 1)  f32 = 1 / max(count_s, 1)
    w = w_ref[...].astype(jnp.float32)            # (1, TC): affine w (norm) / 1/(w+eps) (denorm)
    b = b_ref[...].astype(jnp.float32)            # (1, TC)

    T, TC = x.shape
    S = num_segments

    # --- per-segment sum / sum-of-squares: two (S,T)@(T,TC) MXU matmuls against the
    #     same resident one-hot.  No concatenated (T, 2*TC) intermediate.
    #     precision=HIGHEST keeps x / x*x in full f32 on the MXU so the
    #     E[x^2]-E[x]^2 cancellation stays trustworthy.
    seg_sum = jnp.dot(onehot_st, x, precision=lax.Precision.HIGHEST,
                      preferred_element_type=jnp.float32)               # (S, TC)
    seg_sumsq = jnp.dot(onehot_st, x * x, precision=lax.Precision.HIGHEST,
                        preferred_element_type=jnp.float32)             # (S, TC)

    # E[x^2] - E[x]^2 biased variance; matches torch.var(unbiased=False).
    seg_mean = seg_sum * inv_cnt                                        # (S, TC)
    seg_var = jnp.maximum(seg_sumsq * inv_cnt - seg_mean * seg_mean, 0.0)
    seg_std = jnp.sqrt(seg_var + eps)
    seg_inv_std = lax.rsqrt(seg_var + eps)                              # EUP, tiny tile

    # --- whole-sequence statistics derived from the segment sums (no extra (T,TC) sweeps)
    inv_T = 1.0 / float(T)
    g_sum = jnp.sum(seg_sum, axis=0, keepdims=True)                     # (1, TC)
    g_sumsq = jnp.sum(seg_sumsq, axis=0, keepdims=True)
    gmean = g_sum * inv_T
    gvar = jnp.maximum(g_sumsq * inv_T - gmean * gmean, 0.0)

    # --- packed small-stats output: rows [0,S)=segment means, [S,2S)=segment stds,
    #     row 2S = whole-seq mean, row 2S+1 = whole-seq std.  One per-step output DMA.
    stats_ref[0:S, :] = seg_mean
    stats_ref[S:2 * S, :] = seg_std
    stats_ref[2 * S:2 * S + 1, :] = gmean
    stats_ref[2 * S + 1:2 * S + 2, :] = jnp.sqrt(gvar + eps)

    # --- broadcast segment stats back to the time axis: two (T,S)@(S,TC) selection
    #     matmuls (K=S is tiny, HIGHEST is essentially free and keeps the f32 stats exact).
    scale_src = seg_std if denorm else seg_inv_std
    mean_t = jnp.dot(onehot_ts, seg_mean, precision=lax.Precision.HIGHEST,
                     preferred_element_type=jnp.float32)                # (T, TC)
    scale_t = jnp.dot(onehot_ts, scale_src, precision=lax.Precision.HIGHEST,
                      preferred_element_type=jnp.float32)               # (T, TC)

    if denorm:
        # w holds 1/(affine_weight + eps), precomputed in the wrapper (no per-element divide)
        y = (x - b) * w * scale_t + mean_t
    else:
        y = (x - mean_t) * scale_t * w + b
    out_ref[...] = y.astype(out_ref.dtype)


def _pick_c_tile(batch, c_padded, seq_len, x_itemsize,
                 vmem_budget=48 * 1024 * 1024):
    """Widest lane-dense feature tile that (a) divides the padded C, (b) keeps the
    per-step VMEM footprint under budget (v7x physical VMEM is only 64 MiB), and
    (c) leaves >=2 parallel grid steps when possible (v7x has 2 TensorCores)."""
    def footprint(ct):
        # double-buffered x + out in their own dtype, plus ~6 f32 (T, ct) temporaries
        return (2 * 2 * x_itemsize + 6 * 4) * seq_len * ct

    c_tile = 128
    for cand in (512, 384, 256, 128):
        if c_padded % cand == 0 and footprint(cand) <= vmem_budget:
            c_tile = cand
            break
    if batch * (c_padded // c_tile) < 2 and c_padded >= 256:
        half = (c_padded // 2) // 128 * 128
        c_tile = half if (half >= 128 and c_padded % half == 0) else 128
    return c_tile


def _llsa_pallas(x, seg_id, weight_or_invw, bias, *, eps, denorm, num_segments):
    B, T, C = x.shape
    S = num_segments

    # lane-dense feature padding (pad w with 1, b/x with 0; padded lanes are sliced off)
    Cp = _round_up(max(C, 128), 128)
    if Cp != C:
        x = jnp.pad(x, ((0, 0), (0, 0), (0, Cp - C)))
        weight_or_invw = jnp.pad(weight_or_invw.astype(jnp.float32),
                                 ((0, Cp - C),), constant_values=1.0)
        bias = jnp.pad(bias.astype(jnp.float32), ((0, Cp - C),))
    w2 = weight_or_invw.reshape(1, Cp).astype(jnp.float32)
    b2 = bias.reshape(1, Cp).astype(jnp.float32)

    c_tile = _pick_c_tile(B, Cp, T, x.dtype.itemsize)

    # one-hot segment membership (both orientations) and per-segment inverse counts:
    # batch/feature independent, precomputed once, tiny and resident across the grid.
    onehot_ts = (seg_id[:, None] == jnp.arange(S)[None, :]).astype(jnp.float32)   # (T, S)
    onehot_st = onehot_ts.T                                                       # (S, T)
    counts = jnp.sum(onehot_ts, axis=0)
    inv_cnt = (1.0 / jnp.maximum(counts, 1.0)).reshape(S, 1)

    kernel = functools.partial(_llsa_kernel, eps=float(eps),
                               denorm=bool(denorm), num_segments=S)

    n_stat_rows = 2 * S + 2
    out_shapes = (
        jax.ShapeDtypeStruct((B, T, Cp), x.dtype),               # normalized / denormalized x
        jax.ShapeDtypeStruct((B, n_stat_rows, Cp), jnp.float32),  # packed stats
    )

    out, stats = pl.pallas_call(
        kernel,
        out_shape=out_shapes,
        grid=(B, Cp // c_tile),
        in_specs=[
            pl.BlockSpec((S, T), lambda bi, ci: (0, 0)),                   # one-hot^T (resident)
            pl.BlockSpec((T, S), lambda bi, ci: (0, 0)),                   # one-hot   (resident)
            pl.BlockSpec((S, 1), lambda bi, ci: (0, 0)),                   # 1/count   (resident)
            pl.BlockSpec((None, T, c_tile), lambda bi, ci: (bi, 0, ci)),   # x slab
            pl.BlockSpec((1, c_tile), lambda bi, ci: (0, ci)),             # affine weight / 1/(w+eps)
            pl.BlockSpec((1, c_tile), lambda bi, ci: (0, ci)),             # affine bias
        ],
        out_specs=(
            pl.BlockSpec((None, T, c_tile), lambda bi, ci: (bi, 0, ci)),
            pl.BlockSpec((None, n_stat_rows, c_tile), lambda bi, ci: (bi, 0, ci)),
        ),
        compiler_params=pltpu.CompilerParams(
            dimension_semantics=("parallel", "parallel"),
            vmem_limit_bytes=64 * 1024 * 1024),
    )(onehot_st, onehot_ts, inv_cnt, x, w2, b2)

    # unpack / strip the feature padding
    seg_mean = stats[:, :S, :C]
    seg_std = stats[:, S:2 * S, :C]
    gmean = stats[:, 2 * S:2 * S + 1, :C]
    gstd = stats[:, 2 * S + 1:2 * S + 2, :C]
    return out[:, :, :C], seg_mean, seg_std, gmean, gstd


# ------------------------------ glue (plain JAX) -----------------------------

def detect_change_points(x, threshold):
    """Deterministic surrogate for BinaryClaSPSegmentation.

    # TODO(synk): ClaSP (claspy.BinaryClaSPSegmentation) is an external CPU
    # algorithm with no Pallas equivalent; replaced by a mean-abs-diff
    # threshold heuristic shared across the batch (matching the PyTorch code's
    # "any batch has a change point at i" boundary rule).
    """
    diff = jnp.mean(jnp.abs(x[:, 1:, :].astype(jnp.float32)
                            - x[:, :-1, :].astype(jnp.float32)), axis=(0, 2))   # (T-1,)
    cp = jnp.concatenate(
        [jnp.zeros((1,), jnp.int32), (diff > threshold).astype(jnp.int32)])
    return cp                                                                   # (T,)


def _segment_ids(change_points, max_segments):
    """Compact per-timestep segment ids, capped to a static multiple of 8."""
    S = _round_up(max(int(max_segments), 1), 8)
    seg_id = jnp.cumsum(change_points.astype(jnp.int32))                        # (T,)
    seg_id = jnp.minimum(seg_id, S - 1)   # segments past the cap merge into the last slot
    return seg_id, S


def llsa_forward(x, weight, bias, mode, *, change_points=None,
                 eps=1e-5, change_point_threshold=0.1, max_segments=8):
    if mode == "norm":
        cp = detect_change_points(x, change_point_threshold)
        seg_id, S = _segment_ids(cp, max_segments)
        out, seg_means, seg_stds, gmean, gstd = _llsa_pallas(
            x, seg_id, weight, bias, eps=eps, denorm=False, num_segments=S)
        return (out, seg_means, seg_stds, gmean, gstd), cp
    elif mode == "denorm":
        assert change_points is not None, "denorm needs change_points from the norm pass"
        seg_id, S = _segment_ids(change_points, max_segments)
        inv_w = 1.0 / (weight.astype(jnp.float32) + eps)    # divide once in the wrapper
        out, _, _, _, _ = _llsa_pallas(
            x, seg_id, inv_w, bias, eps=eps, denorm=True, num_segments=S)
        return out
    else:
        raise NotImplementedError(mode)


# ------------------------------ reference check ------------------------------

def _np_reference_norm(x, cp, w, b, eps):
    x = np.asarray(x, dtype=np.float64); cp = np.asarray(cp)
    B, T, C = x.shape
    out = x.copy()
    bounds = [0] + [i for i in range(1, T) if cp[i] > 0] + [T]
    for s, e in zip(bounds[:-1], bounds[1:]):
        seg = x[:, s:e, :]
        m = seg.mean(axis=1, keepdims=True)
        sd = np.sqrt(seg.var(axis=1, keepdims=True) + eps)
        out[:, s:e, :] = (seg - m) / sd * w.reshape(1, 1, C) + b.reshape(1, 1, C)
    return out.astype(np.float32)


# ----------------------------------- main ------------------------------------

if __name__ == "__main__":
    key = jax.random.PRNGKey(0)
    B, T, C = 2, 8, 4                      # batch=2, seq=8, num_features=4
    x = jax.random.normal(key, (B, T, C), dtype=jnp.float32)

    # deterministic parameter init (matches nn.Parameter(torch.ones/zeros))
    affine_weight = jnp.ones((C,), jnp.float32)
    affine_bias = jnp.zeros((C,), jnp.float32)

    # --- mode='norm' (f32) ---
    (x_norm, seg_means, seg_stds, gmean, gstd), cp = llsa_forward(
        x, affine_weight, affine_bias, "norm",
        eps=1e-5, change_point_threshold=1.2, max_segments=8)
    jax.block_until_ready((x_norm, seg_means, seg_stds, gmean, gstd, cp))

    # --- mode='denorm' (uses the stored change points, like the module) ---
    x_denorm = llsa_forward(x_norm, affine_weight, affine_bias, "denorm",
                            change_points=cp, eps=1e-5, max_segments=8)
    jax.block_until_ready(x_denorm)

    # correctness: hot path vs explicit per-segment loop
    ref = _np_reference_norm(x, cp, np.ones((C,), np.float32),
                             np.zeros((C,), np.float32), 1e-5)
    np.testing.assert_allclose(np.asarray(x_norm), ref, atol=1e-4, rtol=1e-4)

    # correctness: whole-sequence stats (the module's _get_statistics state)
    np.testing.assert_allclose(np.asarray(gmean)[:, 0, :],
                               np.asarray(x).mean(axis=1), atol=1e-5, rtol=1e-5)
    np.testing.assert_allclose(
        np.asarray(gstd)[:, 0, :],
        np.sqrt(np.asarray(x).var(axis=1) + 1e-5), atol=1e-5, rtol=1e-5)

    # --- bf16 end-to-end path (memory-bound win on real shapes; stats stay f32 in-kernel) ---
    xb = x.astype(jnp.bfloat16)
    (xb_norm, _, _, _, _), cp_b = llsa_forward(
        xb, affine_weight, affine_bias, "norm",
        eps=1e-5, change_point_threshold=1.2, max_segments=8)
    jax.block_until_ready(xb_norm)
    ref_b = _np_reference_norm(np.asarray(xb, dtype=np.float32), cp_b,
                               np.ones((C,), np.float32), np.zeros((C,), np.float32), 1e-5)
    np.testing.assert_allclose(np.asarray(xb_norm).astype(np.float32), ref_b,
                               atol=5e-2, rtol=5e-2)

    print("KERNEL_OK")
</pallas_src>

<mosaic_0001>
module attributes {stable_mosaic.version = 11 : i64} {
  func.func @_llsa_kernel(%arg0: i32, %arg1: i32, %arg2: memref<8x8xf32, #tpu.memory_space<vmem>>, %arg3: memref<8x8xf32, #tpu.memory_space<vmem>>, %arg4: memref<8x1xf32, #tpu.memory_space<vmem>>, %arg5: memref<1x8x128xf32, #tpu.memory_space<vmem>>, %arg6: memref<1x128xf32, #tpu.memory_space<vmem>>, %arg7: memref<1x128xf32, #tpu.memory_space<vmem>>, %arg8: memref<1x8x128xf32, #tpu.memory_space<vmem>>, %arg9: memref<1x18x128xf32, #tpu.memory_space<vmem>>) attributes {dimension_semantics = [#tpu.dimension_semantics<parallel>, #tpu.dimension_semantics<parallel>], iteration_bounds = array<i64: 2, 1>, scalar_prefetch = 0 : i64, scratch_operands = 0 : i64, tpu.core_type = #tpu.core_type<tc>, window_params = [{pipeline_mode = #tpu.pipeline_mode<synchronous>, transform_indices = @transform_0, window_bounds = array<i64: 8, 8>}, {pipeline_mode = #tpu.pipeline_mode<synchronous>, transform_indices = @transform_1, window_bounds = array<i64: 8, 8>}, {pipeline_mode = #tpu.pipeline_mode<synchronous>, transform_indices = @transform_2, window_bounds = array<i64: 8, 1>}, {transform_indices = @transform_3, window_bounds = array<i64: 1, 8, 128>}, {transform_indices = @transform_4, window_bounds = array<i64: 1, 128>}, {transform_indices = @transform_5, window_bounds = array<i64: 1, 128>}, {transform_indices = @transform_6, window_bounds = array<i64: 1, 8, 128>}, {transform_indices = @transform_7, window_bounds = array<i64: 1, 18, 128>}]} {
    %c0 = arith.constant 0 : index
    %c0_0 = arith.constant 0 : index
    %c0_1 = arith.constant 0 : index
    %0 = vector.load %arg5[%c0, %c0_0, %c0_1] : memref<1x8x128xf32, #tpu.memory_space<vmem>>, vector<1x8x128xf32>
    %1 = vector.shape_cast %0 : vector<1x8x128xf32> to vector<8x128xf32>
    %c0_2 = arith.constant 0 : index
    %c0_3 = arith.constant 0 : index
    %2 = vector.load %arg2[%c0_2, %c0_3] : memref<8x8xf32, #tpu.memory_space<vmem>>, vector<8x8xf32>
    %c0_4 = arith.constant 0 : index
    %c0_5 = arith.constant 0 : index
    %3 = vector.load %arg3[%c0_4, %c0_5] : memref<8x8xf32, #tpu.memory_space<vmem>>, vector<8x8xf32>
    %c0_6 = arith.constant 0 : index
    %c0_7 = arith.constant 0 : index
    %4 = vector.load %arg4[%c0_6, %c0_7] : memref<8x1xf32, #tpu.memory_space<vmem>>, vector<8x1xf32>
    %c0_8 = arith.constant 0 : index
    %c0_9 = arith.constant 0 : index
    %5 = vector.load %arg6[%c0_8, %c0_9] : memref<1x128xf32, #tpu.memory_space<vmem>>, vector<1x128xf32>
    %c0_10 = arith.constant 0 : index
    %c0_11 = arith.constant 0 : index
    %6 = vector.load %arg7[%c0_10, %c0_11] : memref<1x128xf32, #tpu.memory_space<vmem>>, vector<1x128xf32>
    %cst = arith.constant dense<0.000000e+00> : vector<8x128xf32>
    %7 = tpu.matmul %2, %1, %cst {dimension_numbers = #tpu.dot_dimension_numbers<[1], [0], [0], [1], [0, 0, 1, 1], [], []>, precision = #tpu.contract_precision<fp32>} : vector<8x8xf32>, vector<8x128xf32>, vector<8x128xf32> -> vector<8x128xf32>
    %8 = arith.mulf %1, %1 : vector<8x128xf32>
    %cst_12 = arith.constant dense<0.000000e+00> : vector<8x128xf32>
    %9 = tpu.matmul %2, %8, %cst_12 {dimension_numbers = #tpu.dot_dimension_numbers<[1], [0], [0], [1], [0, 0, 1, 1], [], []>, precision = #tpu.contract_precision<fp32>} : vector<8x8xf32>, vector<8x128xf32>, vector<8x128xf32> -> vector<8x128xf32>
    %10 = vector.broadcast %4 : vector<8x1xf32> to vector<8x128xf32>
    %11 = arith.mulf %7, %10 : vector<8x128xf32>
    %12 = vector.broadcast %4 : vector<8x1xf32> to vector<8x128xf32>
    %13 = arith.mulf %9, %12 : vector<8x128xf32>
    %14 = arith.mulf %11, %11 : vector<8x128xf32>
    %15 = arith.subf %13, %14 : vector<8x128xf32>
    %cst_13 = arith.constant 0.000000e+00 : f32
    %16 = vector.broadcast %cst_13 : f32 to vector<8x128xf32>
    %17 = arith.maximumf %15, %16 : vector<8x128xf32>
    %cst_14 = arith.constant 9.99999974E-6 : f32
    %18 = vector.broadcast %cst_14 : f32 to vector<8x128xf32>
    %19 = arith.addf %17, %18 : vector<8x128xf32>
    %20 = math.sqrt %19 : vector<8x128xf32>
    %cst_15 = arith.constant 9.99999974E-6 : f32
    %21 = vector.broadcast %cst_15 : f32 to vector<8x128xf32>
    %22 = arith.addf %17, %21 : vector<8x128xf32>
    %23 = math.rsqrt %22 : vector<8x128xf32>
    %cst_16 = arith.constant dense<0.000000e+00> : vector<128xf32>
    %24 = vector.multi_reduction <add>, %7, %cst_16 [0] : vector<8x128xf32> to vector<128xf32>
    %25 = vector.shape_cast %24 : vector<128xf32> to vector<1x128xf32>
    %cst_17 = arith.constant dense<0.000000e+00> : vector<128xf32>
    %26 = vector.multi_reduction <add>, %9, %cst_17 [0] : vector<8x128xf32> to vector<128xf32>
    %27 = vector.shape_cast %26 : vector<128xf32> to vector<1x128xf32>
    %cst_18 = arith.constant 1.250000e-01 : f32
    %28 = vector.broadcast %cst_18 : f32 to vector<1x128xf32>
    %29 = arith.mulf %25, %28 : vector<1x128xf32>
    %cst_19 = arith.constant 1.250000e-01 : f32
    %30 = vector.broadcast %cst_19 : f32 to vector<1x128xf32>
    %31 = arith.mulf %27, %30 : vector<1x128xf32>
    %32 = arith.mulf %29, %29 : vector<1x128xf32>
    %33 = arith.subf %31, %32 : vector<1x128xf32>
    %cst_20 = arith.constant 0.000000e+00 : f32
    %34 = vector.broadcast %cst_20 : f32 to vector<1x128xf32>
    %35 = arith.maximumf %33, %34 : vector<1x128xf32>
    %c0_21 = arith.constant 0 : index
    %c0_22 = arith.constant 0 : index
    %c0_23 = arith.constant 0 : index
    %36 = vector.load %arg9[%c0_21, %c0_22, %c0_23] : memref<1x18x128xf32, #tpu.memory_space<vmem>>, vector<1x8x128xf32>
    %37 = vector.shape_cast %36 : vector<1x8x128xf32> to vector<8x128xf32>
    %38 = vector.shape_cast %11 : vector<8x128xf32> to vector<1x8x128xf32>
    tpu.vector_store %arg9[%c0_21, %c0_22, %c0_23], %38 {strides = array<i32>} : memref<1x18x128xf32, #tpu.memory_space<vmem>>, vector<1x8x128xf32>,
    %c0_24 = arith.constant 0 : index
    %c8 = arith.constant 8 : index
    %c0_25 = arith.constant 0 : index
    %39 = vector.load %arg9[%c0_24, %c8, %c0_25] : memref<1x18x128xf32, #tpu.memory_space<vmem>>, vector<1x8x128xf32>
    %40 = vector.shape_cast %39 : vector<1x8x128xf32> to vector<8x128xf32>
    %41 = vector.shape_cast %20 : vector<8x128xf32> to vector<1x8x128xf32>
    tpu.vector_store %arg9[%c0_24, %c8, %c0_25], %41 {strides = array<i32>} : memref<1x18x128xf32, #tpu.memory_space<vmem>>, vector<1x8x128xf32>,
    %c0_26 = arith.constant 0 : index
    %c16 = arith.constant 16 : index
    %c0_27 = arith.constant 0 : index
    %42 = vector.load %arg9[%c0_26, %c16, %c0_27] : memref<1x18x128xf32, #tpu.memory_space<vmem>>, vector<1x1x128xf32>
    %43 = vector.shape_cast %42 : vector<1x1x128xf32> to vector<1x128xf32>
    %44 = vector.shape_cast %29 : vector<1x128xf32> to vector<1x1x128xf32>
    tpu.vector_store %arg9[%c0_26, %c16, %c0_27], %44 {strides = array<i32>} : memref<1x18x128xf32, #tpu.memory_space<vmem>>, vector<1x1x128xf32>,
    %cst_28 = arith.constant 9.99999974E-6 : f32
    %45 = vector.broadcast %cst_28 : f32 to vector<1x128xf32>
    %46 = arith.addf %35, %45 : vector<1x128xf32>
    %47 = math.sqrt %46 : vector<1x128xf32>
    %c0_29 = arith.constant 0 : index
    %c17 = arith.constant 17 : index
    %c0_30 = arith.constant 0 : index
    %48 = vector.load %arg9[%c0_29, %c17, %c0_30] : memref<1x18x128xf32, #tpu.memory_space<vmem>>, vector<1x1x128xf32>
    %49 = vector.shape_cast %48 : vector<1x1x128xf32> to vector<1x128xf32>
    %50 = vector.shape_cast %47 : vector<1x128xf32> to vector<1x1x128xf32>
    tpu.vector_store %arg9[%c0_29, %c17, %c0_30], %50 {strides = array<i32>} : memref<1x18x128xf32, #tpu.memory_space<vmem>>, vector<1x1x128xf32>,
    %cst_31 = arith.constant dense<0.000000e+00> : vector<8x128xf32>
    %51 = tpu.matmul %3, %11, %cst_31 {dimension_numbers = #tpu.dot_dimension_numbers<[1], [0], [0], [1], [0, 0, 1, 1], [], []>, precision = #tpu.contract_precision<fp32>} : vector<8x8xf32>, vector<8x128xf32>, vector<8x128xf32> -> vector<8x128xf32>
    %cst_32 = arith.constant dense<0.000000e+00> : vector<8x128xf32>
    %52 = tpu.matmul %3, %23, %cst_32 {dimension_numbers = #tpu.dot_dimension_numbers<[1], [0], [0], [1], [0, 0, 1, 1], [], []>, precision = #tpu.contract_precision<fp32>} : vector<8x8xf32>, vector<8x128xf32>, vector<8x128xf32> -> vector<8x128xf32>
    %53 = arith.subf %1, %51 : vector<8x128xf32>
    %54 = arith.mulf %53, %52 : vector<8x128xf32>
    %55 = vector.broadcast %5 : vector<1x128xf32> to vector<8x128xf32>
    %56 = arith.mulf %54, %55 : vector<8x128xf32>
    %57 = vector.broadcast %6 : vector<1x128xf32> to vector<8x128xf32>
    %58 = arith.addf %56, %57 : vector<8x128xf32>
    %c0_33 = arith.constant 0 : index
    %c0_34 = arith.constant 0 : index
    %c0_35 = arith.constant 0 : index
    %59 = vector.load %arg8[%c0_33, %c0_34, %c0_35] : memref<1x8x128xf32, #tpu.memory_space<vmem>>, vector<1x8x128xf32>
    %60 = vector.shape_cast %59 : vector<1x8x128xf32> to vector<8x128xf32>
    %61 = vector.shape_cast %58 : vector<8x128xf32> to vector<1x8x128xf32>
    tpu.vector_store %arg8[%c0_33, %c0_34, %c0_35], %61 {strides = array<i32>} : memref<1x8x128xf32, #tpu.memory_space<vmem>>, vector<1x8x128xf32>,
    return
  }
  func.func @transform_0(%arg0: i32, %arg1: i32) -> (i32, i32) {
    %c0_i32 = arith.constant 0 : i32
    %c0_i32_0 = arith.constant 0 : i32
    %c0_i32_1 = arith.constant 0 : i32
    return %c0_i32, %c0_i32_0 : i32, i32
  }
  func.func @transform_1(%arg0: i32, %arg1: i32) -> (i32, i32) {
    %c0_i32 = arith.constant 0 : i32
    %c0_i32_0 = arith.constant 0 : i32
    %c0_i32_1 = arith.constant 0 : i32
    return %c0_i32, %c0_i32_0 : i32, i32
  }
  func.func @transform_2(%arg0: i32, %arg1: i32) -> (i32, i32) {
    %c0_i32 = arith.constant 0 : i32
    %c0_i32_0 = arith.constant 0 : i32
    %c0_i32_1 = arith.constant 0 : i32
    return %c0_i32, %c0_i32_0 : i32, i32
  }
  func.func @transform_3(%arg0: i32, %arg1: i32) -> (i32, i32, i32) {
    %c0_i32 = arith.constant 0 : i32
    %c0_i32_0 = arith.constant 0 : i32
    return %arg0, %c0_i32, %arg1 : i32, i32, i32
  }
  func.func @transform_4(%arg0: i32, %arg1: i32) -> (i32, i32) {
    %c0_i32 = arith.constant 0 : i32
    %c0_i32_0 = arith.constant 0 : i32
    return %c0_i32, %arg1 : i32, i32
  }
  func.func @transform_5(%arg0: i32, %arg1: i32) -> (i32, i32) {
    %c0_i32 = arith.constant 0 : i32
    %c0_i32_0 = arith.constant 0 : i32
    return %c0_i32, %arg1 : i32, i32
  }
  func.func @transform_6(%arg0: i32, %arg1: i32) -> (i32, i32, i32) {
    %c0_i32 = arith.constant 0 : i32
    %c0_i32_0 = arith.constant 0 : i32
    return %arg0, %c0_i32, %arg1 : i32, i32, i32
  }
  func.func @transform_7(%arg0: i32, %arg1: i32) -> (i32, i32, i32) {
    %c0_i32 = arith.constant 0 : i32
    %c0_i32_0 = arith.constant 0 : i32
    return %arg0, %c0_i32, %arg1 : i32, i32, i32
  }
}

</mosaic_0001>

<llo_original>
// kernel: tpu_custom_call.1
$region0: #{tpu_custom_call.1}
  #allocation0 [shape = 'u32[]', space=smem, size = 0x4, offset = 0x4, fixed_abs, tag = 'smem constant byte address 0x4 - core index']
  #allocation1 [shape = 'u32[72,128]{1,0:T(1,128)}', space=vmem, size = 0x9000, scoped, tag = 'internal scratch']
  %s0 = inlined_call_operand.vmem [shape: f32[8,8], index: 0, kind: input, shape index: {}]
  %s1 = inlined_call_operand.hbm [shape: f32[8,8], index: 1, kind: input, shape index: {}]
  %s2 = inlined_call_operand.vmem [shape: f32[8,1], index: 2, kind: input, shape index: {}]
  %s3 = inlined_call_operand.hbm [shape: f32[2,8,128], index: 3, kind: input, shape index: {}]
  %s4 = inlined_call_operand.vmem [shape: f32[1,128], index: 4, kind: input, shape index: {}]
  %s5 = inlined_call_operand.vmem [shape: f32[1,128], index: 5, kind: input, shape index: {}]
  %s6 = inlined_call_operand.hbm [shape: f32[2,8,128], index: 6, kind: output, shape index: {0}]
  %s7 = inlined_call_operand.vmem [shape: f32[2,18,128], index: 7, kind: output, shape index: {1}]
  %8 = xla_tuple %s6, %s7
  %s9 = sld [smem:[#allocation0]]
  $region73: #{tpu_custom_call.1} parent=0
    _
  %s11 = ssub.s32 1, %s9
  %s12 = scalar_select 0, %s11, %s9
  $region1: #{tpu_custom_call.1} parent=0
    #allocation2 [shape = 'u8[4096]{0}', space=vmem, size = 0x1000, scoped, tag = 'input window, operand 1, single buffered']
    #allocation3 [shape = 's32[2]{0}', space=sflag, size = 0x8, scoped, tag = 'scoped memory for tpu_custom_call.1']
    #allocation4 [shape = 's32[2]{0}', space=sflag, size = 0x8, scoped, tag = 'scoped memory for tpu_custom_call.1']
    #allocation5 [shape = 'u8[8192]{0}', space=vmem, size = 0x2000, scoped, tag = 'input window, operand 3']
    #allocation6 [shape = 's32[2]{0}', space=sflag, size = 0x8, scoped, tag = 'scoped memory for tpu_custom_call.1']
    #allocation7 [shape = 'u8[8192]{0}', space=vmem, size = 0x2000, scoped, tag = 'output window, operand 0']
    %13 = vsyncpa [#allocation3], 0
    %14 = vsyncpa [#allocation6], 0
    %s15 = scalar_lea.sflag [#allocation6], 1
    %16 = vsyncpa %s15, 0
    %17 = vsyncpa [#allocation4], 0
    %s18 = scalar_lea.sflag [#allocation4], 1
    %19 = vsyncpa %s18, 0
    loop: start=0, step=1, limit=4
    $region2: #{tpu_custom_call.1} parent=1 // loop_pre_header
      _
    $region3: #{tpu_custom_call.1} parent=1 // loop_header
      %s21 = sphi 0, %s25
      %p22 = scmp.ge.s32.totalorder %s21, 4
      %s28 = sphi 0, %s40
      %s29 = sphi 0, %s36
      %s30 = sphi 0, %s28
      %s31 = sphi 0, %s29
      %s32 = sphi 0, %s30
      %s33 = sphi 0, %s31
      %s41 = sphi 0, %s41
      %s43 = sphi 0, %s41
      %s44 = sphi 0, %s43
      %s58 = sphi 0, %s44
      %s62 = sphi 0, %s62
      %s64 = sphi 0, %s62
      %s65 = sphi 0, %s64
      %s79 = sphi 0, %s65
      %s83 = sphi 0, %s83
      %s85 = sphi 0, %s83
      %s86 = sphi 0, %s85
      %s100 = sphi 0, %s86
      %s108 = sphi 0, %s110
      %s111 = sphi 0, %s108
      %s112 = sphi 0, %s111
      %s128 = sphi 0, %s112
      %s134 = sphi 0, %s136
      %s137 = sphi 0, %s134
      %s138 = sphi 0, %s137
      %s154 = sphi 0, %s138
      %s160 = sphi 0, %s162
      %s163 = sphi 0, %s160
      %s164 = sphi 0, %s163
      %s180 = sphi 0, %s164
      %s188 = sphi 0, %s190
      %s191 = sphi 0, %s188
      %s192 = sphi 0, %s191
      %s208 = sphi 0, %s192
      %s216 = sphi 0, %s218
      %s219 = sphi 0, %s216
      %s220 = sphi 0, %s219
      %s236 = sphi 0, %s220
    $region4: #{tpu_custom_call.1} parent=1 // loop_header_branch
      %24 = sbr.rel (%p22) target = $region8
    $region5: #{tpu_custom_call.1} parent=1 // loop_body
      %s26 = ssub.s32 %s21, 1
      %s27 = ssub.s32 %s21, 2
      %s34 = sadd.s32 1, %s29
      %p35 = scmp.ge.s32.totalorder %s34, 1
      %s36 = scalar_select %p35, 0, %s34
      %s37 = sadd.s32 1, %s28
      %s38 = scalar_select %p35, %s37, %s28
      %p39 = scmp.ge.s32.totalorder %s38, 2
      %s40 = scalar_select %p39, 0, %s38
      %s42 = sadd.s32 %s41, 1
      %p45 = scmp.eq.s32.totalorder %s21, 1
      %p46 = scmp.ne.s32.totalorder %s41, %s43
      %p47 = scmp.eq.s32.totalorder %s21, 0
      %p48 = por %p46, %p47
      %p49 = scmp.ne.s32.totalorder %s41, %s43
      %p50 = scmp.eq.s32.totalorder %s26, 1
      %p51 = por %p49, %p50
      %p52 = scmp.ne.s32.totalorder %s43, %s44
      %p53 = scmp.eq.s32.totalorder %s26, 0
      %p54 = por %p52, %p53
      %p55 = scmp.ne.s32.totalorder %s43, %s44
      %p56 = scmp.eq.s32.totalorder %s27, 1
      %p57 = por %p55, %p56
      %p59 = scmp.ne.s32.totalorder %s44, %s58
      %p60 = scmp.eq.s32.totalorder %s27, 0
      %p61 = por %p59, %p60
      %s63 = sadd.s32 %s62, 1
      %p66 = scmp.eq.s32.totalorder %s21, 1
      %p67 = scmp.ne.s32.totalorder %s62, %s64
      %p68 = scmp.eq.s32.totalorder %s21, 0
      %p69 = por %p67, %p68
      %p70 = scmp.ne.s32.totalorder %s62, %s64
      %p71 = scmp.eq.s32.totalorder %s26, 1
      %p72 = por %p70, %p71
      %p73 = scmp.ne.s32.totalorder %s64, %s65
      %p74 = scmp.eq.s32.totalorder %s26, 0
      %p75 = por %p73, %p74
      %p76 = scmp.ne.s32.totalorder %s64, %s65
      %p77 = scmp.eq.s32.totalorder %s27, 1
      %p78 = por %p76, %p77
      %p80 = scmp.ne.s32.totalorder %s65, %s79
      %p81 = scmp.eq.s32.totalorder %s27, 0
      %p82 = por %p80, %p81
      %s84 = sadd.s32 %s83, 1
      %p87 = scmp.eq.s32.totalorder %s21, 1
      %p88 = scmp.ne.s32.totalorder %s83, %s85
      %p89 = scmp.eq.s32.totalorder %s21, 0
      %p90 = por %p88, %p89
      %p91 = scmp.ne.s32.totalorder %s83, %s85
      %p92 = scmp.eq.s32.totalorder %s26, 1
      %p93 = por %p91, %p92
      %p94 = scmp.ne.s32.totalorder %s85, %s86
      %p95 = scmp.eq.s32.totalorder %s26, 0
      %p96 = por %p94, %p95
      %p97 = scmp.ne.s32.totalorder %s85, %s86
      %p98 = scmp.eq.s32.totalorder %s27, 1
      %p99 = por %p97, %p98
      %p101 = scmp.ne.s32.totalorder %s86, %s100
      %p102 = scmp.eq.s32.totalorder %s27, 0
      %p103 = por %p101, %p102
      %s104 = ssub.s32 %s28, %s40
      %s105 = ssub.s32 %s29, %s36
      %s106 = sor.u32 %s104, %s105
      %p107 = scmp.eq.s32.totalorder %s106, 0
      %s109 = sadd.s32 %s108, 1
      %s110 = scalar_select %p107, %s108, %s109
      %p113 = pneg %p107
      %p114 = scmp.eq.s32.totalorder %s21, 1
      %p115 = por %p113, %p114
      %p116 = scmp.ne.s32.totalorder %s108, %s111
      %p117 = scmp.eq.s32.totalorder %s21, 0
      %p118 = por %p116, %p117
      %p119 = scmp.ne.s32.totalorder %s108, %s111
      %p120 = scmp.eq.s32.totalorder %s26, 1
      %p121 = por %p119, %p120
      %p122 = scmp.ne.s32.totalorder %s111, %s112
      %p123 = scmp.eq.s32.totalorder %s26, 0
      %p124 = por %p122, %p123
      %p125 = scmp.ne.s32.totalorder %s111, %s112
      %p126 = scmp.eq.s32.totalorder %s27, 1
      %p127 = por %p125, %p126
      %p129 = scmp.ne.s32.totalorder %s112, %s128
      %p130 = scmp.eq.s32.totalorder %s27, 0
      %p131 = por %p129, %p130
      %s132 = ssub.s32 %s29, %s36
      %p133 = scmp.eq.s32.totalorder %s132, 0
      %s135 = sadd.s32 %s134, 1
      %s136 = scalar_select %p133, %s134, %s135
      %p139 = pneg %p133
      %p140 = scmp.eq.s32.totalorder %s21, 1
      %p141 = por %p139, %p140
      %p142 = scmp.ne.s32.totalorder %s134, %s137
      %p143 = scmp.eq.s32.totalorder %s21, 0
      %p144 = por %p142, %p143
      %p145 = scmp.ne.s32.totalorder %s134, %s137
      %p146 = scmp.eq.s32.totalorder %s26, 1
      %p147 = por %p145, %p146
      %p148 = scmp.ne.s32.totalorder %s137, %s138
      %p149 = scmp.eq.s32.totalorder %s26, 0
      %p150 = por %p148, %p149
      %p151 = scmp.ne.s32.totalorder %s137, %s138
      %p152 = scmp.eq.s32.totalorder %s27, 1
      %p153 = por %p151, %p152
      %p155 = scmp.ne.s32.totalorder %s138, %s154
      %p156 = scmp.eq.s32.totalorder %s27, 0
      %p157 = por %p155, %p156
      %s158 = ssub.s32 %s29, %s36
      %p159 = scmp.eq.s32.totalorder %s158, 0
      %s161 = sadd.s32 %s160, 1
      %s162 = scalar_select %p159, %s160, %s161
      %p165 = pneg %p159
      %p166 = scmp.eq.s32.totalorder %s21, 1
      %p167 = por %p165, %p166
      %p168 = scmp.ne.s32.totalorder %s160, %s163
      %p169 = scmp.eq.s32.totalorder %s21, 0
      %p170 = por %p168, %p169
      %p171 = scmp.ne.s32.totalorder %s160, %s163
      %p172 = scmp.eq.s32.totalorder %s26, 1
      %p173 = por %p171, %p172
      %p174 = scmp.ne.s32.totalorder %s163, %s164
      %p175 = scmp.eq.s32.totalorder %s26, 0
      %p176 = por %p174, %p175
      %p177 = scmp.ne.s32.totalorder %s163, %s164
      %p178 = scmp.eq.s32.totalorder %s27, 1
      %p179 = por %p177, %p178
      %p181 = scmp.ne.s32.totalorder %s164, %s180
      %p182 = scmp.eq.s32.totalorder %s27, 0
      %p183 = por %p181, %p182
      %s184 = ssub.s32 %s28, %s40
      %s185 = ssub.s32 %s29, %s36
      %s186 = sor.u32 %s184, %s185
      %p187 = scmp.eq.s32.totalorder %s186, 0
      %s189 = sadd.s32 %s188, 1
      %s190 = scalar_select %p187, %s188, %s189
      %p193 = pneg %p187
      %p194 = scmp.eq.s32.totalorder %s21, 1
      %p195 = por %p193, %p194
      %p196 = scmp.ne.s32.totalorder %s188, %s191
      %p197 = scmp.eq.s32.totalorder %s21, 0
      %p198 = por %p196, %p197
      %p199 = scmp.ne.s32.totalorder %s188, %s191
      %p200 = scmp.eq.s32.totalorder %s26, 1
      %p201 = por %p199, %p200
      %p202 = scmp.ne.s32.totalorder %s191, %s192
      %p203 = scmp.eq.s32.totalorder %s26, 0
      %p204 = por %p202, %p203
      %p205 = scmp.ne.s32.totalorder %s191, %s192
      %p206 = scmp.eq.s32.totalorder %s27, 1
      %p207 = por %p205, %p206
      %p209 = scmp.ne.s32.totalorder %s192, %s208
      %p210 = scmp.eq.s32.totalorder %s27, 0
      %p211 = por %p209, %p210
      %s212 = ssub.s32 %s28, %s40
      %s213 = ssub.s32 %s29, %s36
      %s214 = sor.u32 %s212, %s213
      %p215 = scmp.eq.s32.totalorder %s214, 0
      %s217 = sadd.s32 %s216, 1
      %s218 = scalar_select %p215, %s216, %s217
      %p221 = pneg %p215
      %p222 = scmp.eq.s32.totalorder %s21, 1
      %p223 = por %p221, %p222
      %p224 = scmp.ne.s32.totalorder %s216, %s219
      %p225 = scmp.eq.s32.totalorder %s21, 0
      %p226 = por %p224, %p225
      %p227 = scmp.ne.s32.totalorder %s216, %s219
      %p228 = scmp.eq.s32.totalorder %s26, 1
      %p229 = por %p227, %p228
      %p230 = scmp.ne.s32.totalorder %s219, %s220
      %p231 = scmp.eq.s32.totalorder %s26, 0
      %p232 = por %p230, %p231
      %p233 = scmp.ne.s32.totalorder %s219, %s220
      %p234 = scmp.eq.s32.totalorder %s27, 1
      %p235 = por %p233, %p234
      %p237 = scmp.ne.s32.totalorder %s220, %s236
      %p238 = scmp.eq.s32.totalorder %s27, 0
      %p239 = por %p237, %p238
      %p240 = scmp.le.s32.totalorder 1, %s21
      %p241 = scmp.lt.s32.totalorder %s21, 3
      %p242 = pnand %p240, %p241
      %p243 = pneg %p242
      // Predicated region
      $region9: #{tpu_custom_call.1} parent=5 // pred_check
        _
      $region10: #{tpu_custom_call.1} parent=5 // pred_check_branch
        %245 = sbr.rel (%p242) target = $region12
      $region11: #{tpu_custom_call.1} parent=5 // pred_region
        %s246 = ssub.s32 %s21, 1
        // Predicated region
        $region13: #{tpu_custom_call.1} parent=11 // pred_check
          %p247 = pneg %p54
        $region14: #{tpu_custom_call.1} parent=11 // pred_check_branch
          %249 = sbr.rel (%p247) target = $region16
        $region15: #{tpu_custom_call.1} parent=11 // pred_region
          _
        $region16: #{tpu_custom_call.1} parent=11 // pred_fallthru
          _
        // Predicated region
        $region17: #{tpu_custom_call.1} parent=11 // pred_check
          %p250 = pneg %p75
        $region18: #{tpu_custom_call.1} parent=11 // pred_check_branch
          %252 = sbr.rel (%p250) target = $region20
        $region19: #{tpu_custom_call.1} parent=11 // pred_region
          %254 = vsyncadd [#allocation3], 0
          %s256 = sshll.u32 %s1, 4
          %s257 = int_to_ptr.hbm [resolvable:$true] %s256
          %s258 = sshll.u32 [#allocation2], 4
          %s259 = int_to_ptr.vmem [resolvable:$true] %s258
          %261 = dma.hbm_to_vmem [thread:$0]  %s257, 128, %s259, [#allocation3]
        $region20: #{tpu_custom_call.1} parent=11 // pred_fallthru
          _
        // Predicated region
        $region21: #{tpu_custom_call.1} parent=11 // pred_check
          %p262 = pneg %p96
        $region22: #{tpu_custom_call.1} parent=11 // pred_check_branch
          %264 = sbr.rel (%p262) target = $region24
        $region23: #{tpu_custom_call.1} parent=11 // pred_region
          _
        $region24: #{tpu_custom_call.1} parent=11 // pred_fallthru
          _
        // Predicated region
        $region25: #{tpu_custom_call.1} parent=11 // pred_check
          %p265 = pneg %p150
        $region26: #{tpu_custom_call.1} parent=11 // pred_check_branch
          %267 = sbr.rel (%p265) target = $region28
        $region27: #{tpu_custom_call.1} parent=11 // pred_region
          %p268 = scmp.lt.s32.totalorder %s31, 0
          %s269 = scalar_select %p268, %s31, 0
          %s270 = scalar_lea.vmem %s4, %s269
        $region28: #{tpu_custom_call.1} parent=11 // pred_fallthru
          _
        // Predicated region
        $region29: #{tpu_custom_call.1} parent=11 // pred_check
          %p271 = pneg %p176
        $region30: #{tpu_custom_call.1} parent=11 // pred_check_branch
          %273 = sbr.rel (%p271) target = $region32
        $region31: #{tpu_custom_call.1} parent=11 // pred_region
          %p274 = scmp.lt.s32.totalorder %s31, 0
          %s275 = scalar_select %p274, %s31, 0
          %s276 = scalar_lea.vmem %s5, %s275
        $region32: #{tpu_custom_call.1} parent=11 // pred_fallthru
          _
      $region12: #{tpu_custom_call.1} parent=5 // pred_fallthru
        _
      %p277 = scmp.lt.s32.totalorder %s21, 2
      // Predicated region
      $region33: #{tpu_custom_call.1} parent=5 // pred_check
        %p278 = pneg %p277
      $region34: #{tpu_custom_call.1} parent=5 // pred_check_branch
        %280 = sbr.rel (%p278) target = $region36
      $region35: #{tpu_custom_call.1} parent=5 // pred_region
        // Predicated region
        $region37: #{tpu_custom_call.1} parent=35 // pred_check
          %p281 = pneg %p118
        $region38: #{tpu_custom_call.1} parent=35 // pred_check_branch
          %283 = sbr.rel (%p281) target = $region40
        $region39: #{tpu_custom_call.1} parent=35 // pred_region
          %s284 = sand.u32 %s108, 1
          %s285 = scalar_lea.sflag [#allocation6], %s284
          %s286 = sand.u32 %s108, 1
          %s287 = smul.addr %s286, 8
          %s288 = scalar_lea.vmem [#allocation5], %s287
          %290 = vsyncadd %s285, 0
          %s291 = sadd.s32 %s29, %s28
          %s292 = smul.addr %s291, 8
          %s293 = scalar_lea.hbm %s3, %s292
          %s295 = sshll.u32 %s293, 4
          %s296 = int_to_ptr.hbm [resolvable:$true] %s295
          %s297 = sshll.u32 %s288, 4
          %s298 = int_to_ptr.vmem [resolvable:$true] %s297
          %300 = dma.hbm_to_vmem [thread:$0]  %s296, 128, %s298, %s285
        $region40: #{tpu_custom_call.1} parent=35 // pred_fallthru
          _
      $region36: #{tpu_custom_call.1} parent=5 // pred_fallthru
        _
      %p301 = scmp.le.s32.totalorder 1, %s21
      %p302 = scmp.lt.s32.totalorder %s21, 3
      %p303 = pnand %p301, %p302
      %p304 = pneg %p303
      // Predicated region
      $region41: #{tpu_custom_call.1} parent=5 // pred_check
        _
      $region42: #{tpu_custom_call.1} parent=5 // pred_check_branch
        %306 = sbr.rel (%p303) target = $region44
      $region43: #{tpu_custom_call.1} parent=5 // pred_region
        %s307 = ssub.s32 %s21, 1
        // Predicated region
        $region45: #{tpu_custom_call.1} parent=43 // pred_check
          %p308 = pneg %p75
        $region46: #{tpu_custom_call.1} parent=43 // pred_check_branch
          %310 = sbr.rel (%p308) target = $region48
        $region47: #{tpu_custom_call.1} parent=43 // pred_region
          %312 = dma.done [#allocation3], 128
        $region48: #{tpu_custom_call.1} parent=43 // pred_fallthru
          _
        %s313 = sand.u32 %s111, 1
        %s314 = scalar_lea.sflag [#allocation6], %s313
        %s315 = sand.u32 %s111, 1
        %s316 = smul.addr %s315, 8
        %s317 = scalar_lea.vmem [#allocation5], %s316
        // Predicated region
        $region49: #{tpu_custom_call.1} parent=43 // pred_check
          %p318 = pneg %p124
        $region50: #{tpu_custom_call.1} parent=43 // pred_check_branch
          %320 = sbr.rel (%p318) target = $region52
        $region51: #{tpu_custom_call.1} parent=43 // pred_region
          %322 = dma.done %s314, 128
        $region52: #{tpu_custom_call.1} parent=43 // pred_fallthru
          _
        %p323 = pneg %p54
        %p324 = pneg %p51
        %p325 = pneg %p75
        %p326 = pneg %p72
        %p327 = pneg %p96
        %p328 = pneg %p93
        %s329 = sand.u32 %s111, 1
        %s330 = scalar_lea.sflag [#allocation6], %s329
        %s331 = sand.u32 %s111, 1
        %s332 = smul.addr %s331, 8
        %s333 = scalar_lea.vmem [#allocation5], %s332
        %p334 = pneg %p124
        %p335 = pneg %p121
        %p336 = scmp.lt.s32.totalorder %s31, 0
        %s337 = scalar_select %p336, %s31, 0
        %s338 = scalar_lea.vmem %s4, %s337
        %p339 = pneg %p150
        %p340 = pneg %p147
        %p341 = scmp.lt.s32.totalorder %s31, 0
        %s342 = scalar_select %p341, %s31, 0
        %s343 = scalar_lea.vmem %s5, %s342
        %p344 = pneg %p176
        %p345 = pneg %p173
        %p346 = pneg %p204
        %p347 = pneg %p201
        %s348 = sand.u32 %s191, 1
        %s349 = scalar_lea.sflag [#allocation4], %s348
        %s350 = sand.u32 %s191, 1
        %s351 = smul.addr %s350, 8
        %s352 = scalar_lea.vmem [#allocation7], %s351
        %p353 = pneg %p232
        %p354 = pneg %p229
        %p355 = scmp.lt.s32.totalorder %s30, 1
        %s356 = scalar_select %p355, %s30, 1
        %p357 = scmp.lt.s32.totalorder %s31, 0
        %s358 = scalar_select %p357, %s31, 0
        %s359 = smul.addr %s356, 3
        %s360 = sadd.s32 %s358, %s359
        %s361 = smul.addr %s360, 8
        %s362 = scalar_lea.vmem %s7, %s361
        %p363 = scmp.lt.s32.totalorder %s31, 0
        %s364 = scalar_select %p363, %s31, 0
        %s365 = scalar_lea.vmem %s4, %s364
        %p366 = scmp.lt.s32.totalorder %s31, 0
        %s367 = scalar_select %p366, %s31, 0
        %s368 = scalar_lea.vmem %s5, %s367
        %p369 = scmp.lt.s32.totalorder %s30, 1
        %s370 = scalar_select %p369, %s30, 1
        %p371 = scmp.lt.s32.totalorder %s31, 0
        %s372 = scalar_select %p371, %s31, 0
        %s373 = smul.addr %s370, 3
        %s374 = sadd.s32 %s372, %s373
        %s375 = smul.addr %s374, 8
        %s376 = scalar_lea.vmem %s7, %s375
        %v377 = vld [vmem:[%s317] sm:$0xff]
        %v378 = vld [vmem:[%s0] sm:$0xff]
        %v379 = vld [vmem:[#allocation2] sm:$0xff]
        %v380 = vld [vmem:[%s2] sm:$0xff]
        %v381 = vld [vmem:[%s365] sm:$0x1]
        %v382 = vld [vmem:[%s368] sm:$0x1]
        %vm383 = vcmask 64512
        %v385 = vsel %vm383, %v378, 0
        %387 = vmatpush.msra.mxu0 0.0
        %388 = vmatpush.msra.mxu0 0.0
        %389 = vmatpush.msra.mxu0 0.0
        %390 = vmatpush.msra.mxu0 0.0
        %391 = vmatpush.msra.mxu0 0.0
        %392 = vmatpush.msra.mxu0 0.0
        %393 = vmatpush.msra.mxu0 0.0
        %394 = vmatpush.msra.mxu0 0.0
        %395 = vmatpush.msra.mxu0 0.0
        %396 = vmatpush.msra.mxu0 0.0
        %397 = vmatpush.msra.mxu0 0.0
        %398 = vmatpush.msra.mxu0 0.0
        %399 = vmatpush.msra.mxu0 0.0
        %400 = vmatpush.msra.mxu0 0.0
        %401 = vmatpush.msra.mxu0 0.0
        %v402 = vand.u32 %v377, 4294901760
        %403 = vmatpush.msra.mxu0 %v402
        %v404 = vand.u32 %v385, 4294901760
        %v405 = vsub.f32 %v385, %v404
        %v406 = vand.u32 %v405, 4294901760
        %v407 = vsub.f32 %v405, %v406
        %v408 = vand.u32 %v407, 4294901760
        %409 = vmatmul.f32.gmra.mxu0 %v408
        %v410 = vpop.f32.mrf.mxu0
        %v411 = vadd.f32 0.0, %v410
        %412 = vdwg.mxu0
        %413 = vmatpush.msra.mxu0 0.0
        %414 = vmatpush.msra.mxu0 0.0
        %415 = vmatpush.msra.mxu0 0.0
        %416 = vmatpush.msra.mxu0 0.0
        %417 = vmatpush.msra.mxu0 0.0
        %418 = vmatpush.msra.mxu0 0.0
        %419 = vmatpush.msra.mxu0 0.0
        %420 = vmatpush.msra.mxu0 0.0
        %421 = vmatpush.msra.mxu0 0.0
        %422 = vmatpush.msra.mxu0 0.0
        %423 = vmatpush.msra.mxu0 0.0
        %424 = vmatpush.msra.mxu0 0.0
        %425 = vmatpush.msra.mxu0 0.0
        %426 = vmatpush.msra.mxu0 0.0
        %427 = vmatpush.msra.mxu0 0.0
        %v428 = vand.u32 %v377, 4294901760
        %v429 = vsub.f32 %v377, %v428
        %v430 = vand.u32 %v429, 4294901760
        %v431 = vsub.f32 %v429, %v430
        %v432 = vand.u32 %v431, 4294901760
        %433 = vmatpush.msra.mxu0 %v432
        %v434 = vand.u32 %v385, 4294901760
        %435 = vmatmul.f32.gmra.mxu0 %v434
        %v436 = vpop.f32.mrf.mxu0
        %v437 = vadd.f32 %v411, %v436
        %438 = vdwg.mxu0
        %439 = vmatpush.msra.mxu0 0.0
        %440 = vmatpush.msra.mxu0 0.0
        %441 = vmatpush.msra.mxu0 0.0
        %442 = vmatpush.msra.mxu0 0.0
        %443 = vmatpush.msra.mxu0 0.0
        %444 = vmatpush.msra.mxu0 0.0
        %445 = vmatpush.msra.mxu0 0.0
        %446 = vmatpush.msra.mxu0 0.0
        %447 = vmatpush.msra.mxu0 0.0
        %448 = vmatpush.msra.mxu0 0.0
        %449 = vmatpush.msra.mxu0 0.0
        %450 = vmatpush.msra.mxu0 0.0
        %451 = vmatpush.msra.mxu0 0.0
        %452 = vmatpush.msra.mxu0 0.0
        %453 = vmatpush.msra.mxu0 0.0
        %v454 = vand.u32 %v377, 4294901760
        %v455 = vsub.f32 %v377, %v454
        %456 = vmatpush.msra.mxu0 %v455
        %v457 = vand.u32 %v385, 4294901760
        %v458 = vsub.f32 %v385, %v457
        %459 = vmatmul.f32.gmra.mxu0 %v458
        %v460 = vpop.f32.mrf.mxu0
        %v461 = vadd.f32 %v437, %v460
        %462 = vdwg.mxu0
        %463 = vmatpush.msra.mxu0 0.0
        %464 = vmatpush.msra.mxu0 0.0
        %465 = vmatpush.msra.mxu0 0.0
        %466 = vmatpush.msra.mxu0 0.0
        %467 = vmatpush.msra.mxu0 0.0
        %468 = vmatpush.msra.mxu0 0.0
        %469 = vmatpush.msra.mxu0 0.0
        %470 = vmatpush.msra.mxu0 0.0
        %471 = vmatpush.msra.mxu0 0.0
        %472 = vmatpush.msra.mxu0 0.0
        %473 = vmatpush.msra.mxu0 0.0
        %474 = vmatpush.msra.mxu0 0.0
        %475 = vmatpush.msra.mxu0 0.0
        %476 = vmatpush.msra.mxu0 0.0
        %477 = vmatpush.msra.mxu0 0.0
        %v478 = vand.u32 %v377, 4294901760
        %479 = vmatpush.msra.mxu0 %v478
        %v480 = vand.u32 %v385, 4294901760
        %v481 = vsub.f32 %v385, %v480
        %v482 = vand.u32 %v481, 4294901760
        %483 = vmatmul.f32.gmra.mxu0 %v482
        %v484 = vpop.f32.mrf.mxu0
        %v485 = vadd.f32 %v461, %v484
        %486 = vdwg.mxu0
        %487 = vmatpush.msra.mxu0 0.0
        %488 = vmatpush.msra.mxu0 0.0
        %489 = vmatpush.msra.mxu0 0.0
        %490 = vmatpush.msra.mxu0 0.0
        %491 = vmatpush.msra.mxu0 0.0
        %492 = vmatpush.msra.mxu0 0.0
        %493 = vmatpush.msra.mxu0 0.0
        %494 = vmatpush.msra.mxu0 0.0
        %495 = vmatpush.msra.mxu0 0.0
        %496 = vmatpush.msra.mxu0 0.0
        %497 = vmatpush.msra.mxu0 0.0
        %498 = vmatpush.msra.mxu0 0.0
        %499 = vmatpush.msra.mxu0 0.0
        %500 = vmatpush.msra.mxu0 0.0
        %501 = vmatpush.msra.mxu0 0.0
        %v502 = vand.u32 %v377, 4294901760
        %v503 = vsub.f32 %v377, %v502
        %v504 = vand.u32 %v503, 4294901760
        %505 = vmatpush.msra.mxu0 %v504
        %v506 = vand.u32 %v385, 4294901760
        %507 = vmatmul.f32.gmra.mxu0 %v506
        %v508 = vpop.f32.mrf.mxu0
        %v509 = vadd.f32 %v485, %v508
        %510 = vdwg.mxu0
        %511 = vmatpush.msra.mxu0 0.0
        %512 = vmatpush.msra.mxu0 0.0
        %513 = vmatpush.msra.mxu0 0.0
        %514 = vmatpush.msra.mxu0 0.0
        %515 = vmatpush.msra.mxu0 0.0
        %516 = vmatpush.msra.mxu0 0.0
        %517 = vmatpush.msra.mxu0 0.0
        %518 = vmatpush.msra.mxu0 0.0
        %519 = vmatpush.msra.mxu0 0.0
        %520 = vmatpush.msra.mxu0 0.0
        %521 = vmatpush.msra.mxu0 0.0
        %522 = vmatpush.msra.mxu0 0.0
        %523 = vmatpush.msra.mxu0 0.0
        %524 = vmatpush.msra.mxu0 0.0
        %525 = vmatpush.msra.mxu0 0.0
        %v526 = vand.u32 %v377, 4294901760
        %527 = vmatpush.msra.mxu0 %v526
        %v528 = vand.u32 %v385, 4294901760
        %529 = vmatmul.f32.gmra.mxu0 %v528
        %v530 = vpop.f32.mrf.mxu0
        %v531 = vadd.f32 %v509, %v530
        %532 = vdwg.mxu0
        %v533 = vmul.f32 %v377, %v377
        %534 = vmatpush.msra.mxu0 0.0
        %535 = vmatpush.msra.mxu0 0.0
        %536 = vmatpush.msra.mxu0 0.0
        %537 = vmatpush.msra.mxu0 0.0
        %538 = vmatpush.msra.mxu0 0.0
        %539 = vmatpush.msra.mxu0 0.0
        %540 = vmatpush.msra.mxu0 0.0
        %541 = vmatpush.msra.mxu0 0.0
        %542 = vmatpush.msra.mxu0 0.0
        %543 = vmatpush.msra.mxu0 0.0
        %544 = vmatpush.msra.mxu0 0.0
        %545 = vmatpush.msra.mxu0 0.0
        %546 = vmatpush.msra.mxu0 0.0
        %547 = vmatpush.msra.mxu0 0.0
        %548 = vmatpush.msra.mxu0 0.0
        %v549 = vand.u32 %v533, 4294901760
        %550 = vmatpush.msra.mxu0 %v549
        %v551 = vand.u32 %v385, 4294901760
        %v552 = vsub.f32 %v385, %v551
        %v553 = vand.u32 %v552, 4294901760
        %v554 = vsub.f32 %v552, %v553
        %v555 = vand.u32 %v554, 4294901760
        %556 = vmatmul.f32.gmra.mxu0 %v555
        %v557 = vpop.f32.mrf.mxu0
        %v558 = vadd.f32 0.0, %v557
        %559 = vdwg.mxu0
        %560 = vmatpush.msra.mxu0 0.0
        %561 = vmatpush.msra.mxu0 0.0
        %562 = vmatpush.msra.mxu0 0.0
        %563 = vmatpush.msra.mxu0 0.0
        %564 = vmatpush.msra.mxu0 0.0
        %565 = vmatpush.msra.mxu0 0.0
        %566 = vmatpush.msra.mxu0 0.0
        %567 = vmatpush.msra.mxu0 0.0
        %568 = vmatpush.msra.mxu0 0.0
        %569 = vmatpush.msra.mxu0 0.0
        %570 = vmatpush.msra.mxu0 0.0
        %571 = vmatpush.msra.mxu0 0.0
        %572 = vmatpush.msra.mxu0 0.0
        %573 = vmatpush.msra.mxu0 0.0
        %574 = vmatpush.msra.mxu0 0.0
        %v575 = vand.u32 %v533, 4294901760
        %v576 = vsub.f32 %v533, %v575
        %v577 = vand.u32 %v576, 4294901760
        %v578 = vsub.f32 %v576, %v577
        %v579 = vand.u32 %v578, 4294901760
        %580 = vmatpush.msra.mxu0 %v579
        %v581 = vand.u32 %v385, 4294901760
        %582 = vmatmul.f32.gmra.mxu0 %v581
        %v583 = vpop.f32.mrf.mxu0
        %v584 = vadd.f32 %v558, %v583
        %585 = vdwg.mxu0
        %586 = vmatpush.msra.mxu0 0.0
        %587 = vmatpush.msra.mxu0 0.0
        %588 = vmatpush.msra.mxu0 0.0
        %589 = vmatpush.msra.mxu0 0.0
        %590 = vmatpush.msra.mxu0 0.0
        %591 = vmatpush.msra.mxu0 0.0
        %592 = vmatpush.msra.mxu0 0.0
        %593 = vmatpush.msra.mxu0 0.0
        %594 = vmatpush.msra.mxu0 0.0
        %595 = vmatpush.msra.mxu0 0.0
        %596 = vmatpush.msra.mxu0 0.0
        %597 = vmatpush.msra.mxu0 0.0
        %598 = vmatpush.msra.mxu0 0.0
        %599 = vmatpush.msra.mxu0 0.0
        %600 = vmatpush.msra.mxu0 0.0
        %v601 = vand.u32 %v533, 4294901760
        %v602 = vsub.f32 %v533, %v601
        %603 = vmatpush.msra.mxu0 %v602
        %v604 = vand.u32 %v385, 4294901760
        %v605 = vsub.f32 %v385, %v604
        %606 = vmatmul.f32.gmra.mxu0 %v605
        %v607 = vpop.f32.mrf.mxu0
        %v608 = vadd.f32 %v584, %v607
        %609 = vdwg.mxu0
        %610 = vmatpush.msra.mxu0 0.0
        %611 = vmatpush.msra.mxu0 0.0
        %612 = vmatpush.msra.mxu0 0.0
        %613 = vmatpush.msra.mxu0 0.0
        %614 = vmatpush.msra.mxu0 0.0
        %615 = vmatpush.msra.mxu0 0.0
        %616 = vmatpush.msra.mxu0 0.0
        %617 = vmatpush.msra.mxu0 0.0
        %618 = vmatpush.msra.mxu0 0.0
        %619 = vmatpush.msra.mxu0 0.0
        %620 = vmatpush.msra.mxu0 0.0
        %621 = vmatpush.msra.mxu0 0.0
        %622 = vmatpush.msra.mxu0 0.0
        %623 = vmatpush.msra.mxu0 0.0
        %624 = vmatpush.msra.mxu0 0.0
        %v625 = vand.u32 %v533, 4294901760
        %626 = vmatpush.msra.mxu0 %v625
        %v627 = vand.u32 %v385, 4294901760
        %v628 = vsub.f32 %v385, %v627
        %v629 = vand.u32 %v628, 4294901760
        %630 = vmatmul.f32.gmra.mxu0 %v629
        %v631 = vpop.f32.mrf.mxu0
        %v632 = vadd.f32 %v608, %v631
        %633 = vdwg.mxu0
        %634 = vmatpush.msra.mxu0 0.0
        %635 = vmatpush.msra.mxu0 0.0
        %636 = vmatpush.msra.mxu0 0.0
        %637 = vmatpush.msra.mxu0 0.0
        %638 = vmatpush.msra.mxu0 0.0
        %639 = vmatpush.msra.mxu0 0.0
        %640 = vmatpush.msra.mxu0 0.0
        %641 = vmatpush.msra.mxu0 0.0
        %642 = vmatpush.msra.mxu0 0.0
        %643 = vmatpush.msra.mxu0 0.0
        %644 = vmatpush.msra.mxu0 0.0
        %645 = vmatpush.msra.mxu0 0.0
        %646 = vmatpush.msra.mxu0 0.0
        %647 = vmatpush.msra.mxu0 0.0
        %648 = vmatpush.msra.mxu0 0.0
        %v649 = vand.u32 %v533, 4294901760
        %v650 = vsub.f32 %v533, %v649
        %v651 = vand.u32 %v650, 4294901760
        %652 = vmatpush.msra.mxu0 %v651
        %v653 = vand.u32 %v385, 4294901760
        %654 = vmatmul.f32.gmra.mxu0 %v653
        %v655 = vpop.f32.mrf.mxu0
        %v656 = vadd.f32 %v632, %v655
        %657 = vdwg.mxu0
        %658 = vmatpush.msra.mxu0 0.0
        %659 = vmatpush.msra.mxu0 0.0
        %660 = vmatpush.msra.mxu0 0.0
        %661 = vmatpush.msra.mxu0 0.0
        %662 = vmatpush.msra.mxu0 0.0
        %663 = vmatpush.msra.mxu0 0.0
        %664 = vmatpush.msra.mxu0 0.0
        %665 = vmatpush.msra.mxu0 0.0
        %666 = vmatpush.msra.mxu0 0.0
        %667 = vmatpush.msra.mxu0 0.0
        %668 = vmatpush.msra.mxu0 0.0
        %669 = vmatpush.msra.mxu0 0.0
        %670 = vmatpush.msra.mxu0 0.0
        %671 = vmatpush.msra.mxu0 0.0
        %672 = vmatpush.msra.mxu0 0.0
        %v673 = vand.u32 %v533, 4294901760
        %674 = vmatpush.msra.mxu0 %v673
        %v675 = vand.u32 %v385, 4294901760
        %676 = vmatmul.f32.gmra.mxu0 %v675
        %v677 = vpop.f32.mrf.mxu0
        %v678 = vadd.f32 %v656, %v677
        %679 = vdwg.mxu0
        %681 = vset.pattern.permute.xlu0 0
        %682 = vperm.xlu0 %681, %v380
        %v683 = vpop.permute.xlu0 %682
        %v685 = vmul.f32 %v531, %v683
        %v686 = vmul.f32 %v678, %v683
        %v687 = vmul.f32 %v685, %v685
        %v688 = vsub.f32 %v686, %v687
        %v689 = vmax.f32 %v688, 0.0
        %v690 = vadd.f32 %v689, 1e-05
        %v691 = vrsqrt.pop %v690
        %v692 = vmul.f32 %v691, %v690
        %v693 = vmul.f32 %v692, %v691
        %v694 = vmul.f32 0.5, %v693
        %v695 = vsub.f32 1.5, %v694
        %v696 = vmul.f32 %v691, %v695
        %v697 = vmul.f32 %v690, %v696
        %vm698 = vcmp.eq.f32.partialorder %v690, inf
        %v699 = vsel %vm698, %v690, %v697
        %vm700 = vcmp.eq.f32.partialorder %v690, 0.0
        %v701 = vand.u32 %v690, 2147483648
        %v702 = vsel %vm700, %v701, %v699
        %v703 = vrsqrt.pop %v690
        %v704 = vmul.f32 %v703, %v690
        %v705 = vmul.f32 %v704, %v703
        %v706 = vmul.f32 0.5, %v705
        %v707 = vsub.f32 1.5, %v706
        %v708 = vmul.f32 %v703, %v707
        %vm709 = vweird.f32 %v690
        %vm710 = vweird.f32 %v703
        %vm711 = vmor %vm709, %vm710
        %v712 = vsel %vm711, %v703, %v708
        %v713 = vrot.slane %v531, 4
        %v714 = vadd.f32 %v531, %v713
        %v715 = vrot.slane %v714, 2
        %v716 = vadd.f32 %v714, %v715
        %v717 = vrot.slane %v716, 1
        %v718 = vadd.f32 %v716, %v717
        %v719 = vrot.slane %v678, 4
        %v720 = vadd.f32 %v678, %v719
        %v721 = vrot.slane %v720, 2
        %v722 = vadd.f32 %v720, %v721
        %v723 = vrot.slane %v722, 1
        %v724 = vadd.f32 %v722, %v723
        %v725 = vmul.f32 %v718, 0.125
        %v726 = vmul.f32 %v724, 0.125
        %v727 = vmul.f32 %v725, %v725
        %v728 = vsub.f32 %v726, %v727
        %v729 = vmax.f32 %v728, 0.0
        %730 = vst [vmem:[%s376] sm:$0xff] %v685
        %731 = vst [vmem:[%s376 + $0x8] sm:$0xff] %v702
        %732 = vst [vmem:[%s376 + $0x10] sm:$0x1] %v725
        %v733 = vadd.f32 %v729, 1e-05
        %v734 = vrsqrt.pop %v733
        %v735 = vmul.f32 %v734, %v733
        %v736 = vmul.f32 %v735, %v734
        %v737 = vmul.f32 0.5, %v736
        %v738 = vsub.f32 1.5, %v737
        %v739 = vmul.f32 %v734, %v738
        %v740 = vmul.f32 %v733, %v739
        %vm741 = vcmp.eq.f32.partialorder %v733, inf
        %v742 = vsel %vm741, %v733, %v740
        %vm743 = vcmp.eq.f32.partialorder %v733, 0.0
        %v744 = vand.u32 %v733, 2147483648
        %v745 = vsel %vm743, %v744, %v742
        %746 = vst [vmem:[%s376 + $0x11] sm:$0x1] %v745
        %v748 = vsel %vm383, %v379, 0
        %750 = vmatpush.msra.mxu0 0.0
        %751 = vmatpush.msra.mxu0 0.0
        %752 = vmatpush.msra.mxu0 0.0
        %753 = vmatpush.msra.mxu0 0.0
        %754 = vmatpush.msra.mxu0 0.0
        %755 = vmatpush.msra.mxu0 0.0
        %756 = vmatpush.msra.mxu0 0.0
        %757 = vmatpush.msra.mxu0 0.0
        %758 = vmatpush.msra.mxu0 0.0
        %759 = vmatpush.msra.mxu0 0.0
        %760 = vmatpush.msra.mxu0 0.0
        %761 = vmatpush.msra.mxu0 0.0
        %762 = vmatpush.msra.mxu0 0.0
        %763 = vmatpush.msra.mxu0 0.0
        %764 = vmatpush.msra.mxu0 0.0
        %v765 = vand.u32 %v685, 4294901760
        %766 = vmatpush.msra.mxu0 %v765
        %v767 = vand.u32 %v748, 4294901760
        %v768 = vsub.f32 %v748, %v767
        %v769 = vand.u32 %v768, 4294901760
        %v770 = vsub.f32 %v768, %v769
        %v771 = vand.u32 %v770, 4294901760
        %772 = vmatmul.f32.gmra.mxu0 %v771
        %v773 = vpop.f32.mrf.mxu0
        %v774 = vadd.f32 0.0, %v773
        %775 = vdwg.mxu0
        %776 = vmatpush.msra.mxu0 0.0
        %777 = vmatpush.msra.mxu0 0.0
        %778 = vmatpush.msra.mxu0 0.0
        %779 = vmatpush.msra.mxu0 0.0
        %780 = vmatpush.msra.mxu0 0.0
        %781 = vmatpush.msra.mxu0 0.0
        %782 = vmatpush.msra.mxu0 0.0
        %783 = vmatpush.msra.mxu0 0.0
        %784 = vmatpush.msra.mxu0 0.0
        %785 = vmatpush.msra.mxu0 0.0
        %786 = vmatpush.msra.mxu0 0.0
        %787 = vmatpush.msra.mxu0 0.0
        %788 = vmatpush.msra.mxu0 0.0
        %789 = vmatpush.msra.mxu0 0.0
        %790 = vmatpush.msra.mxu0 0.0
        %v791 = vand.u32 %v685, 4294901760
        %v792 = vsub.f32 %v685, %v791
        %v793 = vand.u32 %v792, 4294901760
        %v794 = vsub.f32 %v792, %v793
        %v795 = vand.u32 %v794, 4294901760
        %796 = vmatpush.msra.mxu0 %v795
        %v797 = vand.u32 %v748, 4294901760
        %798 = vmatmul.f32.gmra.mxu0 %v797
        %v799 = vpop.f32.mrf.mxu0
        %v800 = vadd.f32 %v774, %v799
        %801 = vdwg.mxu0
        %802 = vmatpush.msra.mxu0 0.0
        %803 = vmatpush.msra.mxu0 0.0
        %804 = vmatpush.msra.mxu0 0.0
        %805 = vmatpush.msra.mxu0 0.0
        %806 = vmatpush.msra.mxu0 0.0
        %807 = vmatpush.msra.mxu0 0.0
        %808 = vmatpush.msra.mxu0 0.0
        %809 = vmatpush.msra.mxu0 0.0
        %810 = vmatpush.msra.mxu0 0.0
        %811 = vmatpush.msra.mxu0 0.0
        %812 = vmatpush.msra.mxu0 0.0
        %813 = vmatpush.msra.mxu0 0.0
        %814 = vmatpush.msra.mxu0 0.0
        %815 = vmatpush.msra.mxu0 0.0
        %816 = vmatpush.msra.mxu0 0.0
        %v817 = vand.u32 %v685, 4294901760
        %v818 = vsub.f32 %v685, %v817
        %819 = vmatpush.msra.mxu0 %v818
        %v820 = vand.u32 %v748, 4294901760
        %v821 = vsub.f32 %v748, %v820
        %822 = vmatmul.f32.gmra.mxu0 %v821
        %v823 = vpop.f32.mrf.mxu0
        %v824 = vadd.f32 %v800, %v823
        %825 = vdwg.mxu0
        %826 = vmatpush.msra.mxu0 0.0
        %827 = vmatpush.msra.mxu0 0.0
        %828 = vmatpush.msra.mxu0 0.0
        %829 = vmatpush.msra.mxu0 0.0
        %830 = vmatpush.msra.mxu0 0.0
        %831 = vmatpush.msra.mxu0 0.0
        %832 = vmatpush.msra.mxu0 0.0
        %833 = vmatpush.msra.mxu0 0.0
        %834 = vmatpush.msra.mxu0 0.0
        %835 = vmatpush.msra.mxu0 0.0
        %836 = vmatpush.msra.mxu0 0.0
        %837 = vmatpush.msra.mxu0 0.0
        %838 = vmatpush.msra.mxu0 0.0
        %839 = vmatpush.msra.mxu0 0.0
        %840 = vmatpush.msra.mxu0 0.0
        %v841 = vand.u32 %v685, 4294901760
        %842 = vmatpush.msra.mxu0 %v841
        %v843 = vand.u32 %v748, 4294901760
        %v844 = vsub.f32 %v748, %v843
        %v845 = vand.u32 %v844, 4294901760
        %846 = vmatmul.f32.gmra.mxu0 %v845
        %v847 = vpop.f32.mrf.mxu0
        %v848 = vadd.f32 %v824, %v847
        %849 = vdwg.mxu0
        %850 = vmatpush.msra.mxu0 0.0
        %851 = vmatpush.msra.mxu0 0.0
        %852 = vmatpush.msra.mxu0 0.0
        %853 = vmatpush.msra.mxu0 0.0
        %854 = vmatpush.msra.mxu0 0.0
        %855 = vmatpush.msra.mxu0 0.0
        %856 = vmatpush.msra.mxu0 0.0
        %857 = vmatpush.msra.mxu0 0.0
        %858 = vmatpush.msra.mxu0 0.0
        %859 = vmatpush.msra.mxu0 0.0
        %860 = vmatpush.msra.mxu0 0.0
        %861 = vmatpush.msra.mxu0 0.0
        %862 = vmatpush.msra.mxu0 0.0
        %863 = vmatpush.msra.mxu0 0.0
        %864 = vmatpush.msra.mxu0 0.0
        %v865 = vand.u32 %v685, 4294901760
        %v866 = vsub.f32 %v685, %v865
        %v867 = vand.u32 %v866, 4294901760
        %868 = vmatpush.msra.mxu0 %v867
        %v869 = vand.u32 %v748, 4294901760
        %870 = vmatmul.f32.gmra.mxu0 %v869
        %v871 = vpop.f32.mrf.mxu0
        %v872 = vadd.f32 %v848, %v871
        %873 = vdwg.mxu0
        %874 = vmatpush.msra.mxu0 0.0
        %875 = vmatpush.msra.mxu0 0.0
        %876 = vmatpush.msra.mxu0 0.0
        %877 = vmatpush.msra.mxu0 0.0
        %878 = vmatpush.msra.mxu0 0.0
        %879 = vmatpush.msra.mxu0 0.0
        %880 = vmatpush.msra.mxu0 0.0
        %881 = vmatpush.msra.mxu0 0.0
        %882 = vmatpush.msra.mxu0 0.0
        %883 = vmatpush.msra.mxu0 0.0
        %884 = vmatpush.msra.mxu0 0.0
        %885 = vmatpush.msra.mxu0 0.0
        %886 = vmatpush.msra.mxu0 0.0
        %887 = vmatpush.msra.mxu0 0.0
        %888 = vmatpush.msra.mxu0 0.0
        %v889 = vand.u32 %v685, 4294901760
        %890 = vmatpush.msra.mxu0 %v889
        %v891 = vand.u32 %v748, 4294901760
        %892 = vmatmul.f32.gmra.mxu0 %v891
        %v893 = vpop.f32.mrf.mxu0
        %v894 = vadd.f32 %v872, %v893
        %895 = vdwg.mxu0
        %896 = vmatpush.msra.mxu0 0.0
        %897 = vmatpush.msra.mxu0 0.0
        %898 = vmatpush.msra.mxu0 0.0
        %899 = vmatpush.msra.mxu0 0.0
        %900 = vmatpush.msra.mxu0 0.0
        %901 = vmatpush.msra.mxu0 0.0
        %902 = vmatpush.msra.mxu0 0.0
        %903 = vmatpush.msra.mxu0 0.0
        %904 = vmatpush.msra.mxu0 0.0
        %905 = vmatpush.msra.mxu0 0.0
        %906 = vmatpush.msra.mxu0 0.0
        %907 = vmatpush.msra.mxu0 0.0
        %908 = vmatpush.msra.mxu0 0.0
        %909 = vmatpush.msra.mxu0 0.0
        %910 = vmatpush.msra.mxu0 0.0
        %v911 = vand.u32 %v712, 4294901760
        %912 = vmatpush.msra.mxu0 %v911
        %v913 = vand.u32 %v748, 4294901760
        %v914 = vsub.f32 %v748, %v913
        %v915 = vand.u32 %v914, 4294901760
        %v916 = vsub.f32 %v914, %v915
        %v917 = vand.u32 %v916, 4294901760
        %918 = vmatmul.f32.gmra.mxu0 %v917
        %v919 = vpop.f32.mrf.mxu0
        %v920 = vadd.f32 0.0, %v919
        %921 = vdwg.mxu0
        %922 = vmatpush.msra.mxu0 0.0
        %923 = vmatpush.msra.mxu0 0.0
        %924 = vmatpush.msra.mxu0 0.0
        %925 = vmatpush.msra.mxu0 0.0
        %926 = vmatpush.msra.mxu0 0.0
        %927 = vmatpush.msra.mxu0 0.0
        %928 = vmatpush.msra.mxu0 0.0
        %929 = vmatpush.msra.mxu0 0.0
        %930 = vmatpush.msra.mxu0 0.0
        %931 = vmatpush.msra.mxu0 0.0
        %932 = vmatpush.msra.mxu0 0.0
        %933 = vmatpush.msra.mxu0 0.0
        %934 = vmatpush.msra.mxu0 0.0
        %935 = vmatpush.msra.mxu0 0.0
        %936 = vmatpush.msra.mxu0 0.0
        %v937 = vand.u32 %v712, 4294901760
        %v938 = vsub.f32 %v712, %v937
        %v939 = vand.u32 %v938, 4294901760
        %v940 = vsub.f32 %v938, %v939
        %v941 = vand.u32 %v940, 4294901760
        %942 = vmatpush.msra.mxu0 %v941
        %v943 = vand.u32 %v748, 4294901760
        %944 = vmatmul.f32.gmra.mxu0 %v943
        %v945 = vpop.f32.mrf.mxu0
        %v946 = vadd.f32 %v920, %v945
        %947 = vdwg.mxu0
        %948 = vmatpush.msra.mxu0 0.0
        %949 = vmatpush.msra.mxu0 0.0
        %950 = vmatpush.msra.mxu0 0.0
        %951 = vmatpush.msra.mxu0 0.0
        %952 = vmatpush.msra.mxu0 0.0
        %953 = vmatpush.msra.mxu0 0.0
        %954 = vmatpush.msra.mxu0 0.0
        %955 = vmatpush.msra.mxu0 0.0
        %956 = vmatpush.msra.mxu0 0.0
        %957 = vmatpush.msra.mxu0 0.0
        %958 = vmatpush.msra.mxu0 0.0
        %959 = vmatpush.msra.mxu0 0.0
        %960 = vmatpush.msra.mxu0 0.0
        %961 = vmatpush.msra.mxu0 0.0
        %962 = vmatpush.msra.mxu0 0.0
        %v963 = vand.u32 %v712, 4294901760
        %v964 = vsub.f32 %v712, %v963
        %965 = vmatpush.msra.mxu0 %v964
        %v966 = vand.u32 %v748, 4294901760
        %v967 = vsub.f32 %v748, %v966
        %968 = vmatmul.f32.gmra.mxu0 %v967
        %v969 = vpop.f32.mrf.mxu0
        %v970 = vadd.f32 %v946, %v969
        %971 = vdwg.mxu0
        %972 = vmatpush.msra.mxu0 0.0
        %973 = vmatpush.msra.mxu0 0.0
        %974 = vmatpush.msra.mxu0 0.0
        %975 = vmatpush.msra.mxu0 0.0
        %976 = vmatpush.msra.mxu0 0.0
        %977 = vmatpush.msra.mxu0 0.0
        %978 = vmatpush.msra.mxu0 0.0
        %979 = vmatpush.msra.mxu0 0.0
        %980 = vmatpush.msra.mxu0 0.0
        %981 = vmatpush.msra.mxu0 0.0
        %982 = vmatpush.msra.mxu0 0.0
        %983 = vmatpush.msra.mxu0 0.0
        %984 = vmatpush.msra.mxu0 0.0
        %985 = vmatpush.msra.mxu0 0.0
        %986 = vmatpush.msra.mxu0 0.0
        %v987 = vand.u32 %v712, 4294901760
        %988 = vmatpush.msra.mxu0 %v987
        %v989 = vand.u32 %v748, 4294901760
        %v990 = vsub.f32 %v748, %v989
        %v991 = vand.u32 %v990, 4294901760
        %992 = vmatmul.f32.gmra.mxu0 %v991
        %v993 = vpop.f32.mrf.mxu0
        %v994 = vadd.f32 %v970, %v993
        %995 = vdwg.mxu0
        %996 = vmatpush.msra.mxu0 0.0
        %997 = vmatpush.msra.mxu0 0.0
        %998 = vmatpush.msra.mxu0 0.0
        %999 = vmatpush.msra.mxu0 0.0
        %1000 = vmatpush.msra.mxu0 0.0
        %1001 = vmatpush.msra.mxu0 0.0
        %1002 = vmatpush.msra.mxu0 0.0
        %1003 = vmatpush.msra.mxu0 0.0
        %1004 = vmatpush.msra.mxu0 0.0
        %1005 = vmatpush.msra.mxu0 0.0
        %1006 = vmatpush.msra.mxu0 0.0
        %1007 = vmatpush.msra.mxu0 0.0
        %1008 = vmatpush.msra.mxu0 0.0
        %1009 = vmatpush.msra.mxu0 0.0
        %1010 = vmatpush.msra.mxu0 0.0
        %v1011 = vand.u32 %v712, 4294901760
        %v1012 = vsub.f32 %v712, %v1011
        %v1013 = vand.u32 %v1012, 4294901760
        %1014 = vmatpush.msra.mxu0 %v1013
        %v1015 = vand.u32 %v748, 4294901760
        %1016 = vmatmul.f32.gmra.mxu0 %v1015
        %v1017 = vpop.f32.mrf.mxu0
        %v1018 = vadd.f32 %v994, %v1017
        %1019 = vdwg.mxu0
        %1020 = vmatpush.msra.mxu0 0.0
        %1021 = vmatpush.msra.mxu0 0.0
        %1022 = vmatpush.msra.mxu0 0.0
        %1023 = vmatpush.msra.mxu0 0.0
        %1024 = vmatpush.msra.mxu0 0.0
        %1025 = vmatpush.msra.mxu0 0.0
        %1026 = vmatpush.msra.mxu0 0.0
        %1027 = vmatpush.msra.mxu0 0.0
        %1028 = vmatpush.msra.mxu0 0.0
        %1029 = vmatpush.msra.mxu0 0.0
        %1030 = vmatpush.msra.mxu0 0.0
        %1031 = vmatpush.msra.mxu0 0.0
        %1032 = vmatpush.msra.mxu0 0.0
        %1033 = vmatpush.msra.mxu0 0.0
        %1034 = vmatpush.msra.mxu0 0.0
        %v1035 = vand.u32 %v712, 4294901760
        %1036 = vmatpush.msra.mxu0 %v1035
        %v1037 = vand.u32 %v748, 4294901760
        %1038 = vmatmul.f32.gmra.mxu0 %v1037
        %v1039 = vpop.f32.mrf.mxu0
        %v1040 = vadd.f32 %v1018, %v1039
        %1041 = vdwg.mxu0
        %v1042 = vsub.f32 %v377, %v894
        %v1043 = vmul.f32 %v1042, %v1040
        %v1045 = vperm.slane %v381, 0
        %v1047 = vmul.f32 %v1043, %v1045
        %v1049 = vperm.slane %v382, 0
        %v1051 = vadd.f32 %v1047, %v1049
        %1052 = vst [vmem:[%s352] sm:$0xff] %v1051
        %s1053 = sand.u32 %s191, 1
        %s1054 = scalar_lea.sflag [#allocation4], %s1053
        %s1055 = sand.u32 %s191, 1
        %s1056 = smul.addr %s1055, 8
        %s1057 = scalar_lea.vmem [#allocation7], %s1056
        %p1058 = scmp.lt.s32.totalorder %s30, 1
        %s1059 = scalar_select %p1058, %s30, 1
        %p1060 = scmp.lt.s32.totalorder %s31, 0
        %s1061 = scalar_select %p1060, %s31, 0
        %s1062 = smul.addr %s1059, 3
        %s1063 = sadd.s32 %s1061, %s1062
        %s1064 = smul.addr %s1063, 8
        %s1065 = scalar_lea.vmem %s7, %s1064
        // Predicated region
        $region53: #{tpu_custom_call.1} parent=43 // pred_check
          %p1066 = pneg %p201
        $region54: #{tpu_custom_call.1} parent=43 // pred_check_branch
          %1068 = sbr.rel (%p1066) target = $region56
        $region55: #{tpu_custom_call.1} parent=43 // pred_region
          %1070 = vsyncadd %s1054, 0
          %s1071 = sadd.s32 %s31, %s30
          %s1072 = smul.addr %s1071, 8
          %s1073 = scalar_lea.hbm %s6, %s1072
          %s1075 = sshll.u32 %s1057, 4
          %s1076 = int_to_ptr.vmem [resolvable:$true] %s1075
          %s1077 = sshll.u32 %s1073, 4
          %s1078 = int_to_ptr.hbm [resolvable:$true] %s1077
          %1080 = dma.vmem_to_hbm [thread:$0]  %s1076, 128, %s1078, %s1054
        $region56: #{tpu_custom_call.1} parent=43 // pred_fallthru
          _
        // Predicated region
        $region57: #{tpu_custom_call.1} parent=43 // pred_check
          %p1081 = pneg %p229
        $region58: #{tpu_custom_call.1} parent=43 // pred_check_branch
          %1083 = sbr.rel (%p1081) target = $region60
        $region59: #{tpu_custom_call.1} parent=43 // pred_region
          _
        $region60: #{tpu_custom_call.1} parent=43 // pred_fallthru
          _
      $region44: #{tpu_custom_call.1} parent=5 // pred_fallthru
        _
      %p1084 = scmp.le.s32.totalorder 2, %s21
      // Predicated region
      $region61: #{tpu_custom_call.1} parent=5 // pred_check
        %p1085 = pneg %p1084
      $region62: #{tpu_custom_call.1} parent=5 // pred_check_branch
        %1087 = sbr.rel (%p1085) target = $region64
      $region63: #{tpu_custom_call.1} parent=5 // pred_region
        %s1088 = ssub.s32 %s21, 2
        // Predicated region
        $region65: #{tpu_custom_call.1} parent=63 // pred_check
          %p1089 = pneg %p207
        $region66: #{tpu_custom_call.1} parent=63 // pred_check_branch
          %1091 = sbr.rel (%p1089) target = $region68
        $region67: #{tpu_custom_call.1} parent=63 // pred_region
          %s1092 = sand.u32 %s192, 1
          %s1093 = scalar_lea.sflag [#allocation4], %s1092
          %s1094 = sand.u32 %s192, 1
          %s1095 = smul.addr %s1094, 8
          %s1096 = scalar_lea.vmem [#allocation7], %s1095
          %1098 = dma.done %s1093, 128
        $region68: #{tpu_custom_call.1} parent=63 // pred_fallthru
          _
        // Predicated region
        $region69: #{tpu_custom_call.1} parent=63 // pred_check
          %p1099 = pneg %p235
        $region70: #{tpu_custom_call.1} parent=63 // pred_check_branch
          %1101 = sbr.rel (%p1099) target = $region72
        $region71: #{tpu_custom_call.1} parent=63 // pred_region
          %p1102 = scmp.lt.s32.totalorder %s32, 1
          %s1103 = scalar_select %p1102, %s32, 1
          %p1104 = scmp.lt.s32.totalorder %s33, 0
          %s1105 = scalar_select %p1104, %s33, 0
          %s1106 = smul.addr %s1103, 3
          %s1107 = sadd.s32 %s1105, %s1106
          %s1108 = smul.addr %s1107, 8
          %s1109 = scalar_lea.vmem %s7, %s1108
        $region72: #{tpu_custom_call.1} parent=63 // pred_fallthru
          _
      $region64: #{tpu_custom_call.1} parent=5 // pred_fallthru
        _
    $region6: #{tpu_custom_call.1} parent=1 // loop_footer
      %s25 = sadd.s32 1, %s21
    $region7: #{tpu_custom_call.1} parent=1 // loop_footer_branch
      %20 = sbr.rel target = $region3
    $region8: #{tpu_custom_call.1} parent=1 // loop_exit
      _
    %1110 = vsyncpa [#allocation3], 1
    %s1111 = scalar_lea.sflag [#allocation3], 1
    %1112 = vsyncpa %s1111, 1
    %1113 = vsyncpa [#allocation6], 1
    %s1114 = scalar_lea.sflag [#allocation6], 1
    %1115 = vsyncpa %s1114, 1
    %1116 = vsyncpa [#allocation4], 1
    %s1117 = scalar_lea.sflag [#allocation4], 1
    %1118 = vsyncpa %s1117, 1

</llo_original>
